<compile_context>
chip_gen: v7x
topology: tpu7x:2x2x1
jax: 0.10.0
libtpu: 0.0.40
codegen_flags: <defaults>
</compile_context>

<pallas_src>
import functools

import jax
import jax.numpy as jnp
from jax.experimental import pallas as pl
from jax.experimental.pallas import tpu as pltpu


_NEG_BIG = -1e30  # pad logit: exp() underflows to exactly 0, no inf/nan


def _cdiv(a, b):
    return -(-a // b)


def _ceil_to(x, m):
    return ((x + m - 1) // m) * m


def _rdrop_kernel(p_ref, q_ref, *rest, has_mask):
    """One grid step: a (tr, Vp) tile of rows; accumulates into an (8, Vp) block."""
    if has_mask:
        m_ref, out_ref = rest
    else:
        m_ref = None
        (out_ref,) = rest

    @pl.when(pl.program_id(1) == 0)
    def _init():
        out_ref[...] = jnp.zeros_like(out_ref)

    p = p_ref[...].astype(jnp.float32)
    q = q_ref[...].astype(jnp.float32)

    # Numerically stable log-softmax with exponential reuse.
    pm = jnp.max(p, axis=-1, keepdims=True)
    qm = jnp.max(q, axis=-1, keepdims=True)
    ep = jnp.exp(p - pm)
    eq = jnp.exp(q - qm)
    sp_sum = jnp.sum(ep, axis=-1, keepdims=True)
    sq_sum = jnp.sum(eq, axis=-1, keepdims=True)
    lp = (p - pm) - jnp.log(sp_sum)
    lq = (q - qm) - jnp.log(sq_sum)
    # softmax via EUP approximate reciprocal (reuses ep/eq, no second exp pass).
    sp = ep * pl.reciprocal(sp_sum, approx=True)
    sq = eq * pl.reciprocal(sq_sum, approx=True)

    # p_loss + q_loss = sq*(lq-lp) + sp*(lp-lq) = (sq - sp) * (lq - lp)
    # (softmax values are >= 0; underflow-to-zero lanes give an exact 0 product,
    #  so no jnp.where guards are needed.)
    loss = (sq - sp) * (lq - lp)
    if has_mask:
        loss = loss * m_ref[...].astype(jnp.float32)

    tr, vp = loss.shape
    # VPU-only partial reduction into the resident (8, Vp) accumulator block;
    # the cross-lane reduce happens once, outside the kernel.
    out_ref[...] += jnp.sum(loss.reshape(tr // 8, 8, vp), axis=0)


def _rdrop_elementwise_sum(p2, q2, m2, *, row_tile_cap=2048,
                           vmem_input_budget=24 * 1024 * 1024):
    """Returns sum_{elements}( [mask *] (p_kl + q_kl) ) as an f32 scalar."""
    R, V = p2.shape
    has_mask = m2 is not None

    # Lane-pad V to a multiple of 128 (lane-dense vregs / stores).
    Vp = _ceil_to(max(V, 128), 128)
    # TODO(synk): for extremely large V where even 8 rows exceed VMEM, split V
    # over a second reduction axis with an online log-sum-exp.

    # Row tile: largest multiple of 8 such that the double-buffered input
    # streams fit the budget (conservative for v7x's 64 MiB physical VMEM).
    bytes_per_row = 2 * Vp * (2 * jnp.dtype(p2.dtype).itemsize
                              + (4 if has_mask else 0))  # x2 = double buffering
    tr_cap = max(8, min(row_tile_cap, (vmem_input_budget // bytes_per_row) // 8 * 8))

    P = 2  # parallel row split: both TensorCores on v7x; harmless on 1-TC chips
    rows_per_split = _ceil_to(max(_cdiv(R, P), 8), 8)
    tr = min(tr_cap, rows_per_split)
    steps = _cdiv(rows_per_split, tr)
    Rp = P * steps * tr

    pad_r, pad_c = Rp - R, Vp - V
    if pad_r or pad_c:
        # Padded lanes: -1e30 logits -> softmax mass exactly 0 -> 0 contribution.
        # Padded rows: p == q (uniform constant) -> fused loss exactly 0.
        p2 = jnp.pad(p2, ((0, pad_r), (0, pad_c)), constant_values=_NEG_BIG)
        q2 = jnp.pad(q2, ((0, pad_r), (0, pad_c)), constant_values=_NEG_BIG)
        if has_mask:
            m2 = jnp.pad(m2, ((0, pad_r), (0, pad_c)), constant_values=0.0)

    def _row_map(c, i):
        return (c * steps + i, 0)

    in_specs = [pl.BlockSpec((tr, Vp), _row_map),
                pl.BlockSpec((tr, Vp), _row_map)]
    args = [p2, q2]
    if has_mask:
        in_specs.append(pl.BlockSpec((tr, Vp), _row_map))
        args.append(m2)

    out = pl.pallas_call(
        functools.partial(_rdrop_kernel, has_mask=has_mask),
        out_shape=jax.ShapeDtypeStruct((P * 8, Vp), jnp.float32),
        grid_spec=pltpu.PrefetchScalarGridSpec(
            num_scalar_prefetch=0,
            grid=(P, steps),
            in_specs=in_specs,
            out_specs=pl.BlockSpec((8, Vp), lambda c, i: (c, 0)),
        ),
        compiler_params=pltpu.CompilerParams(
            dimension_semantics=("parallel", "arbitrary"),
            vmem_limit_bytes=40 * 1024 * 1024,
        ),
    )(*args)

    return jnp.sum(out)


def rdrop_loss(p, q, pad_mask=None, reduction='none'):
    """R-Drop loss. p, q: (..., V) logits; pad_mask: optional bool, same shape."""
    if reduction not in ('sum', 'mean', 'none', 'batchmean'):
        raise ValueError("reduction must be 'sum', 'mean', 'batchmean' or 'none'")

    shape = p.shape
    V = shape[-1]
    R = 1
    for d in shape[:-1]:
        R *= d
    p2 = p.reshape(R, V)
    q2 = q.reshape(R, V)

    if reduction == 'none':
        m2 = None
        if pad_mask is not None:
            m2 = pad_mask.reshape(R, V).astype(jnp.float32)
        total = _rdrop_elementwise_sum(p2, q2, m2)
        return 0.5 * total

    # PyTorch applies kl_div's 'sum'/'mean'/'batchmean' reduction BEFORE the
    # module's masking; masked_select of the resulting scalar merely replicates
    # it num_true times, so the mask only contributes a multiplicative count.
    total = _rdrop_elementwise_sum(p2, q2, None)
    if reduction == 'sum':
        red = total
    elif reduction == 'mean':
        red = total / jnp.float32(R * V)
    else:  # 'batchmean'
        red = total / jnp.float32(shape[0])
    if pad_mask is not None:
        red = red * jnp.sum(pad_mask.astype(jnp.float32))
    return 0.5 * red


def _rdrop_reference(p, q, pad_mask=None, reduction='none'):
    """Pure-JAX reference mirroring the PyTorch module."""
    lp = jax.nn.log_softmax(p, axis=-1)
    lq = jax.nn.log_softmax(q, axis=-1)
    sp, sq = jnp.exp(lp), jnp.exp(lq)
    p_kl = sq * (lq - lp)
    q_kl = sp * (lp - lq)
    if reduction == 'none':
        p_loss, q_loss = p_kl, q_kl
        if pad_mask is not None:
            m = pad_mask.astype(p_kl.dtype)
            p_loss, q_loss = p_loss * m, q_loss * m
        return (jnp.sum(p_loss) + jnp.sum(q_loss)) / 2.0
    if reduction == 'sum':
        p_loss, q_loss = jnp.sum(p_kl), jnp.sum(q_kl)
    elif reduction == 'mean':
        p_loss, q_loss = jnp.mean(p_kl), jnp.mean(q_kl)
    else:  # 'batchmean'
        p_loss, q_loss = jnp.sum(p_kl) / p.shape[0], jnp.sum(q_kl) / q.shape[0]
    if pad_mask is not None:
        n = jnp.sum(pad_mask.astype(p_kl.dtype))
        p_loss, q_loss = p_loss * n, q_loss * n
    return (p_loss + q_loss) / 2.0


if __name__ == "__main__":
    key = jax.random.PRNGKey(0)
    k1, k2, k3 = jax.random.split(key, 3)

    batch, seq, vocab = 2, 8, 32
    p = jax.random.normal(k1, (batch, seq, vocab), dtype=jnp.float32)
    q = jax.random.normal(k2, (batch, seq, vocab), dtype=jnp.float32)
    pad_mask = jax.random.bernoulli(k3, 0.8, (batch, seq, vocab))

    # Tolerance accounts for the approximate EUP reciprocal in the softmax.
    tol = dict(rtol=5e-3, atol=5e-3)

    # reduction='none' (module default), no mask
    loss = jax.block_until_ready(rdrop_loss(p, q))
    ref = _rdrop_reference(p, q)
    assert jnp.allclose(loss, ref, **tol), (loss, ref)

    # reduction='none', masked
    loss_m = jax.block_until_ready(rdrop_loss(p, q, pad_mask=pad_mask))
    ref_m = _rdrop_reference(p, q, pad_mask=pad_mask)
    assert jnp.allclose(loss_m, ref_m, **tol), (loss_m, ref_m)

    # reduction='sum', no mask
    loss_s = jax.block_until_ready(rdrop_loss(p, q, reduction='sum'))
    ref_s = _rdrop_reference(p, q, reduction='sum')
    assert jnp.allclose(loss_s, ref_s, **tol), (loss_s, ref_s)

    print("KERNEL_OK")
</pallas_src>

<mosaic_0001>
module attributes {stable_mosaic.version = 11 : i64} {
  func.func @_rdrop_kernel(%arg0: i32, %arg1: i32, %arg2: memref<8x128xf32, #tpu.memory_space<vmem>>, %arg3: memref<8x128xf32, #tpu.memory_space<vmem>>, %arg4: memref<8x128xf32, #tpu.memory_space<vmem>>) attributes {dimension_semantics = [#tpu.dimension_semantics<parallel>, #tpu.dimension_semantics<arbitrary>], iteration_bounds = array<i64: 2, 1>, scalar_prefetch = 0 : i64, scratch_operands = 0 : i64, tpu.core_type = #tpu.core_type<tc>, window_params = [{transform_indices = @transform_0, window_bounds = array<i64: 8, 128>}, {transform_indices = @transform_1, window_bounds = array<i64: 8, 128>}, {transform_indices = @transform_2, window_bounds = array<i64: 8, 128>}]} {
    %c0_i32 = arith.constant 0 : i32
    %0 = arith.cmpi eq, %arg1, %c0_i32 : i32
    %1 = arith.extui %0 : i1 to i32
    %c0_i32_0 = arith.constant 0 : i32
    %2 = arith.cmpi ne, %1, %c0_i32_0 : i32
    scf.if %2 {
      %cst_12 = arith.constant 0.000000e+00 : f32
      %43 = vector.broadcast %cst_12 : f32 to vector<8x128xf32>
      %c0_13 = arith.constant 0 : index
      %c0_14 = arith.constant 0 : index
      %44 = vector.load %arg4[%c0_13, %c0_14] : memref<8x128xf32, #tpu.memory_space<vmem>>, vector<8x128xf32>
      tpu.vector_store %arg4[%c0_13, %c0_14], %43 {strides = array<i32>} : memref<8x128xf32, #tpu.memory_space<vmem>>, vector<8x128xf32>,
    } else {
    }
    %c0 = arith.constant 0 : index
    %c0_1 = arith.constant 0 : index
    %3 = vector.load %arg2[%c0, %c0_1] : memref<8x128xf32, #tpu.memory_space<vmem>>, vector<8x128xf32>
    %c0_2 = arith.constant 0 : index
    %c0_3 = arith.constant 0 : index
    %4 = vector.load %arg3[%c0_2, %c0_3] : memref<8x128xf32, #tpu.memory_space<vmem>>, vector<8x128xf32>
    %cst = arith.constant dense<0xFF800000> : vector<8xf32>
    %5 = vector.multi_reduction <maximumf>, %3, %cst [1] : vector<8x128xf32> to vector<8xf32>
    %6 = vector.shape_cast %5 : vector<8xf32> to vector<8x1xf32>
    %cst_4 = arith.constant dense<0xFF800000> : vector<8xf32>
    %7 = vector.multi_reduction <maximumf>, %4, %cst_4 [1] : vector<8x128xf32> to vector<8xf32>
    %8 = vector.shape_cast %7 : vector<8xf32> to vector<8x1xf32>
    %9 = vector.broadcast %6 : vector<8x1xf32> to vector<8x128xf32>
    %10 = arith.subf %3, %9 : vector<8x128xf32>
    %11 = math.exp %10 : vector<8x128xf32>
    %12 = vector.broadcast %8 : vector<8x1xf32> to vector<8x128xf32>
    %13 = arith.subf %4, %12 : vector<8x128xf32>
    %14 = math.exp %13 : vector<8x128xf32>
    %cst_5 = arith.constant dense<0.000000e+00> : vector<8xf32>
    %15 = vector.multi_reduction <add>, %11, %cst_5 [1] : vector<8x128xf32> to vector<8xf32>
    %16 = vector.shape_cast %15 : vector<8xf32> to vector<8x1xf32>
    %cst_6 = arith.constant dense<0.000000e+00> : vector<8xf32>
    %17 = vector.multi_reduction <add>, %14, %cst_6 [1] : vector<8x128xf32> to vector<8xf32>
    %18 = vector.shape_cast %17 : vector<8xf32> to vector<8x1xf32>
    %19 = vector.broadcast %6 : vector<8x1xf32> to vector<8x128xf32>
    %20 = arith.subf %3, %19 : vector<8x128xf32>
    %21 = math.log %16 : vector<8x1xf32>
    %22 = vector.broadcast %21 : vector<8x1xf32> to vector<8x128xf32>
    %23 = arith.subf %20, %22 : vector<8x128xf32>
    %24 = vector.broadcast %8 : vector<8x1xf32> to vector<8x128xf32>
    %25 = arith.subf %4, %24 : vector<8x128xf32>
    %26 = math.log %18 : vector<8x1xf32>
    %27 = vector.broadcast %26 : vector<8x1xf32> to vector<8x128xf32>
    %28 = arith.subf %25, %27 : vector<8x128xf32>
    %29 = tpu.reciprocal %16 {approx = true} : vector<8x1xf32> -> vector<8x1xf32>
    %30 = vector.broadcast %29 : vector<8x1xf32> to vector<8x128xf32>
    %31 = arith.mulf %11, %30 : vector<8x128xf32>
    %32 = tpu.reciprocal %18 {approx = true} : vector<8x1xf32> -> vector<8x1xf32>
    %33 = vector.broadcast %32 : vector<8x1xf32> to vector<8x128xf32>
    %34 = arith.mulf %14, %33 : vector<8x128xf32>
    %35 = arith.subf %34, %31 : vector<8x128xf32>
    %36 = arith.subf %28, %23 : vector<8x128xf32>
    %37 = arith.mulf %35, %36 : vector<8x128xf32>
    %c0_7 = arith.constant 0 : index
    %c0_8 = arith.constant 0 : index
    %38 = vector.load %arg4[%c0_7, %c0_8] : memref<8x128xf32, #tpu.memory_space<vmem>>, vector<8x128xf32>
    %39 = vector.shape_cast %37 : vector<8x128xf32> to vector<1x8x128xf32>
    %cst_9 = arith.constant dense<0.000000e+00> : vector<8x128xf32>
    %40 = vector.multi_reduction <add>, %39, %cst_9 [0] : vector<1x8x128xf32> to vector<8x128xf32>
    %41 = arith.addf %38, %40 : vector<8x128xf32>
    %c0_10 = arith.constant 0 : index
    %c0_11 = arith.constant 0 : index
    %42 = vector.load %arg4[%c0_10, %c0_11] : memref<8x128xf32, #tpu.memory_space<vmem>>, vector<8x128xf32>
    tpu.vector_store %arg4[%c0_10, %c0_11], %41 {strides = array<i32>} : memref<8x128xf32, #tpu.memory_space<vmem>>, vector<8x128xf32>,
    return
  }
  func.func @transform_0(%arg0: i32, %arg1: i32) -> (i32, i32) {
    %c1_i32 = arith.constant 1 : i32
    %0 = arith.muli %arg0, %c1_i32 : i32
    %1 = arith.addi %0, %arg1 : i32
    %c0_i32 = arith.constant 0 : i32
    %c0_i32_0 = arith.constant 0 : i32
    return %1, %c0_i32 : i32, i32
  }
  func.func @transform_1(%arg0: i32, %arg1: i32) -> (i32, i32) {
    %c1_i32 = arith.constant 1 : i32
    %0 = arith.muli %arg0, %c1_i32 : i32
    %1 = arith.addi %0, %arg1 : i32
    %c0_i32 = arith.constant 0 : i32
    %c0_i32_0 = arith.constant 0 : i32
    return %1, %c0_i32 : i32, i32
  }
  func.func @transform_2(%arg0: i32, %arg1: i32) -> (i32, i32) {
    %c0_i32 = arith.constant 0 : i32
    %c0_i32_0 = arith.constant 0 : i32
    return %arg0, %c0_i32 : i32, i32
  }
}

</mosaic_0001>

<llo_original>
// kernel: tpu_custom_call.1
$region0: #{tpu_custom_call.1}
  #allocation0 [shape = 'u32[]', space=smem, size = 0x4, offset = 0x4, fixed_abs, tag = 'smem constant byte address 0x4 - core index']
  #allocation1 [shape = 'u32[144,128]{1,0:T(1,128)}', space=vmem, size = 0x12000, scoped, tag = 'internal scratch']
  %s0 = inlined_call_operand.hbm [shape: f32[16,128], index: 0, kind: input, shape index: {}]
  %s1 = inlined_call_operand.hbm [shape: f32[16,128], index: 1, kind: input, shape index: {}]
  %s2 = inlined_call_operand.hbm [shape: f32[16,128], index: 2, kind: output, shape index: {}]
  %s3 = sld [smem:[#allocation0]]
  $region53: #{tpu_custom_call.1} parent=0
    _
  %s5 = ssub.s32 1, %s3
  %s6 = scalar_select 0, %s5, %s3
  $region1: #{tpu_custom_call.1} parent=0
    #allocation2 [shape = 'u8[8192]{0}', space=vmem, size = 0x2000, scoped, tag = 'input window, operand 0']
    #allocation3 [shape = 's32[2]{0}', space=sflag, size = 0x8, scoped, tag = 'scoped memory for tpu_custom_call.1']
    #allocation4 [shape = 's32[2]{0}', space=sflag, size = 0x8, scoped, tag = 'scoped memory for tpu_custom_call.1']
    #allocation5 [shape = 'u8[8192]{0}', space=vmem, size = 0x2000, scoped, tag = 'input window, operand 1']
    #allocation6 [shape = 's32[2]{0}', space=sflag, size = 0x8, scoped, tag = 'scoped memory for tpu_custom_call.1']
    #allocation7 [shape = 'u8[8192]{0}', space=vmem, size = 0x2000, scoped, tag = 'output window, operand 0']
    %7 = vsyncpa [#allocation3], 0
    %s8 = scalar_lea.sflag [#allocation3], 1
    %9 = vsyncpa %s8, 0
    %10 = vsyncpa [#allocation6], 0
    %s11 = scalar_lea.sflag [#allocation6], 1
    %12 = vsyncpa %s11, 0
    %13 = vsyncpa [#allocation4], 0
    %s14 = scalar_lea.sflag [#allocation4], 1
    %15 = vsyncpa %s14, 0
    loop: start=0, step=1, limit=4
    $region2: #{tpu_custom_call.1} parent=1 // loop_pre_header
      _
    $region3: #{tpu_custom_call.1} parent=1 // loop_header
      %s17 = sphi 0, %s21
      %p18 = scmp.ge.s32.totalorder %s17, 4
      %s24 = sphi 0, %s36
      %s25 = sphi 0, %s32
      %s26 = sphi 0, %s24
      %s27 = sphi 0, %s25
      %s28 = sphi 0, %s26
      %s29 = sphi 0, %s27
      %s41 = sphi 0, %s43
      %s44 = sphi 0, %s41
      %s45 = sphi 0, %s44
      %s61 = sphi 0, %s45
      %s69 = sphi 0, %s71
      %s72 = sphi 0, %s69
      %s73 = sphi 0, %s72
      %s89 = sphi 0, %s73
      %s95 = sphi 0, %s97
      %s98 = sphi 0, %s95
      %s99 = sphi 0, %s98
      %s115 = sphi 0, %s99
    $region4: #{tpu_custom_call.1} parent=1 // loop_header_branch
      %20 = sbr.rel (%p18) target = $region8
    $region5: #{tpu_custom_call.1} parent=1 // loop_body
      %s22 = ssub.s32 %s17, 1
      %s23 = ssub.s32 %s17, 2
      %s30 = sadd.s32 1, %s25
      %p31 = scmp.ge.s32.totalorder %s30, 1
      %s32 = scalar_select %p31, 0, %s30
      %s33 = sadd.s32 1, %s24
      %s34 = scalar_select %p31, %s33, %s24
      %p35 = scmp.ge.s32.totalorder %s34, 2
      %s36 = scalar_select %p35, 0, %s34
      %s37 = sadd.s32 %s24, %s25
      %s38 = sadd.s32 %s36, %s32
      %s39 = ssub.s32 %s37, %s38
      %p40 = scmp.eq.s32.totalorder %s39, 0
      %s42 = sadd.s32 %s41, 1
      %s43 = scalar_select %p40, %s41, %s42
      %p46 = pneg %p40
      %p47 = scmp.eq.s32.totalorder %s17, 1
      %p48 = por %p46, %p47
      %p49 = scmp.ne.s32.totalorder %s41, %s44
      %p50 = scmp.eq.s32.totalorder %s17, 0
      %p51 = por %p49, %p50
      %p52 = scmp.ne.s32.totalorder %s41, %s44
      %p53 = scmp.eq.s32.totalorder %s22, 1
      %p54 = por %p52, %p53
      %p55 = scmp.ne.s32.totalorder %s44, %s45
      %p56 = scmp.eq.s32.totalorder %s22, 0
      %p57 = por %p55, %p56
      %p58 = scmp.ne.s32.totalorder %s44, %s45
      %p59 = scmp.eq.s32.totalorder %s23, 1
      %p60 = por %p58, %p59
      %p62 = scmp.ne.s32.totalorder %s45, %s61
      %p63 = scmp.eq.s32.totalorder %s23, 0
      %p64 = por %p62, %p63
      %s65 = sadd.s32 %s24, %s25
      %s66 = sadd.s32 %s36, %s32
      %s67 = ssub.s32 %s65, %s66
      %p68 = scmp.eq.s32.totalorder %s67, 0
      %s70 = sadd.s32 %s69, 1
      %s71 = scalar_select %p68, %s69, %s70
      %p74 = pneg %p68
      %p75 = scmp.eq.s32.totalorder %s17, 1
      %p76 = por %p74, %p75
      %p77 = scmp.ne.s32.totalorder %s69, %s72
      %p78 = scmp.eq.s32.totalorder %s17, 0
      %p79 = por %p77, %p78
      %p80 = scmp.ne.s32.totalorder %s69, %s72
      %p81 = scmp.eq.s32.totalorder %s22, 1
      %p82 = por %p80, %p81
      %p83 = scmp.ne.s32.totalorder %s72, %s73
      %p84 = scmp.eq.s32.totalorder %s22, 0
      %p85 = por %p83, %p84
      %p86 = scmp.ne.s32.totalorder %s72, %s73
      %p87 = scmp.eq.s32.totalorder %s23, 1
      %p88 = por %p86, %p87
      %p90 = scmp.ne.s32.totalorder %s73, %s89
      %p91 = scmp.eq.s32.totalorder %s23, 0
      %p92 = por %p90, %p91
      %s93 = ssub.s32 %s24, %s36
      %p94 = scmp.eq.s32.totalorder %s93, 0
      %s96 = sadd.s32 %s95, 1
      %s97 = scalar_select %p94, %s95, %s96
      %p100 = pneg %p94
      %p101 = scmp.eq.s32.totalorder %s17, 1
      %p102 = por %p100, %p101
      %p103 = scmp.ne.s32.totalorder %s95, %s98
      %p104 = scmp.eq.s32.totalorder %s17, 0
      %p105 = por %p103, %p104
      %p106 = scmp.ne.s32.totalorder %s95, %s98
      %p107 = scmp.eq.s32.totalorder %s22, 1
      %p108 = por %p106, %p107
      %p109 = scmp.ne.s32.totalorder %s98, %s99
      %p110 = scmp.eq.s32.totalorder %s22, 0
      %p111 = por %p109, %p110
      %p112 = scmp.ne.s32.totalorder %s98, %s99
      %p113 = scmp.eq.s32.totalorder %s23, 1
      %p114 = por %p112, %p113
      %p116 = scmp.ne.s32.totalorder %s99, %s115
      %p117 = scmp.eq.s32.totalorder %s23, 0
      %p118 = por %p116, %p117
      %p119 = scmp.le.s32.totalorder 1, %s17
      %p120 = scmp.lt.s32.totalorder %s17, 3
      %p121 = pnand %p119, %p120
      %p122 = pneg %p121
      // Predicated region
      $region9: #{tpu_custom_call.1} parent=5 // pred_check
        _
      $region10: #{tpu_custom_call.1} parent=5 // pred_check_branch
        %124 = sbr.rel (%p121) target = $region12
      $region11: #{tpu_custom_call.1} parent=5 // pred_region
        %s125 = ssub.s32 %s17, 1
      $region12: #{tpu_custom_call.1} parent=5 // pred_fallthru
        _
      %p126 = scmp.lt.s32.totalorder %s17, 2
      // Predicated region
      $region13: #{tpu_custom_call.1} parent=5 // pred_check
        %p127 = pneg %p126
      $region14: #{tpu_custom_call.1} parent=5 // pred_check_branch
        %129 = sbr.rel (%p127) target = $region16
      $region15: #{tpu_custom_call.1} parent=5 // pred_region
        // Predicated region
        $region17: #{tpu_custom_call.1} parent=15 // pred_check
          %p130 = pneg %p51
        $region18: #{tpu_custom_call.1} parent=15 // pred_check_branch
          %132 = sbr.rel (%p130) target = $region20
        $region19: #{tpu_custom_call.1} parent=15 // pred_region
          %s133 = sand.u32 %s41, 1
          %s134 = scalar_lea.sflag [#allocation3], %s133
          %s135 = sand.u32 %s41, 1
          %s136 = smul.addr %s135, 8
          %s137 = scalar_lea.vmem [#allocation2], %s136
          %s138 = sadd.s32 %s24, %s25
          %s140 = ssub.s32 128, 128
          %141 = vsyncadd %s134, %s140
          %s142 = smul.addr %s138, 128
          %s143 = scalar_lea.hbm %s0, %s142
          %s145 = sshll.u32 %s137, 4
          %s146 = int_to_ptr.vmem [resolvable:$true] %s145
          %148 = dma.hbm_to_vmem [thread:$0]  %s143, 128, %s146, %s134
        $region20: #{tpu_custom_call.1} parent=15 // pred_fallthru
          _
        // Predicated region
        $region21: #{tpu_custom_call.1} parent=15 // pred_check
          %p149 = pneg %p79
        $region22: #{tpu_custom_call.1} parent=15 // pred_check_branch
          %151 = sbr.rel (%p149) target = $region24
        $region23: #{tpu_custom_call.1} parent=15 // pred_region
          %s152 = sand.u32 %s69, 1
          %s153 = scalar_lea.sflag [#allocation6], %s152
          %s154 = sand.u32 %s69, 1
          %s155 = smul.addr %s154, 8
          %s156 = scalar_lea.vmem [#allocation5], %s155
          %s157 = sadd.s32 %s24, %s25
          %s159 = ssub.s32 128, 128
          %160 = vsyncadd %s153, %s159
          %s161 = smul.addr %s157, 128
          %s162 = scalar_lea.hbm %s1, %s161
          %s164 = sshll.u32 %s156, 4
          %s165 = int_to_ptr.vmem [resolvable:$true] %s164
          %167 = dma.hbm_to_vmem [thread:$0]  %s162, 128, %s165, %s153
        $region24: #{tpu_custom_call.1} parent=15 // pred_fallthru
          _
      $region16: #{tpu_custom_call.1} parent=5 // pred_fallthru
        _
      %p168 = scmp.le.s32.totalorder 1, %s17
      %p169 = scmp.lt.s32.totalorder %s17, 3
      %p170 = pnand %p168, %p169
      %p171 = pneg %p170
      // Predicated region
      $region25: #{tpu_custom_call.1} parent=5 // pred_check
        _
      $region26: #{tpu_custom_call.1} parent=5 // pred_check_branch
        %173 = sbr.rel (%p170) target = $region28
      $region27: #{tpu_custom_call.1} parent=5 // pred_region
        %s174 = ssub.s32 %s17, 1
        %s175 = sand.u32 %s44, 1
        %s176 = scalar_lea.sflag [#allocation3], %s175
        %s177 = sand.u32 %s44, 1
        %s178 = smul.addr %s177, 8
        %s179 = scalar_lea.vmem [#allocation2], %s178
        // Predicated region
        $region29: #{tpu_custom_call.1} parent=27 // pred_check
          %p180 = pneg %p57
        $region30: #{tpu_custom_call.1} parent=27 // pred_check_branch
          %182 = sbr.rel (%p180) target = $region32
        $region31: #{tpu_custom_call.1} parent=27 // pred_region
          %183 = dma.done %s176, 128
        $region32: #{tpu_custom_call.1} parent=27 // pred_fallthru
          _
        %s184 = sand.u32 %s72, 1
        %s185 = scalar_lea.sflag [#allocation6], %s184
        %s186 = sand.u32 %s72, 1
        %s187 = smul.addr %s186, 8
        %s188 = scalar_lea.vmem [#allocation5], %s187
        // Predicated region
        $region33: #{tpu_custom_call.1} parent=27 // pred_check
          %p189 = pneg %p85
        $region34: #{tpu_custom_call.1} parent=27 // pred_check_branch
          %191 = sbr.rel (%p189) target = $region36
        $region35: #{tpu_custom_call.1} parent=27 // pred_region
          %192 = dma.done %s185, 128
        $region36: #{tpu_custom_call.1} parent=27 // pred_fallthru
          _
        %s193 = sand.u32 %s44, 1
        %s194 = scalar_lea.sflag [#allocation3], %s193
        %s195 = sand.u32 %s44, 1
        %s196 = smul.addr %s195, 8
        %s197 = scalar_lea.vmem [#allocation2], %s196
        %p198 = pneg %p57
        %p199 = pneg %p54
        %s200 = sand.u32 %s72, 1
        %s201 = scalar_lea.sflag [#allocation6], %s200
        %s202 = sand.u32 %s72, 1
        %s203 = smul.addr %s202, 8
        %s204 = scalar_lea.vmem [#allocation5], %s203
        %p205 = pneg %p85
        %p206 = pneg %p82
        %p207 = pneg %p111
        %p208 = pneg %p108
        %s209 = sand.u32 %s98, 1
        %s210 = scalar_lea.sflag [#allocation4], %s209
        %s211 = sand.u32 %s98, 1
        %s212 = smul.addr %s211, 8
        %s213 = scalar_lea.vmem [#allocation7], %s212
        %s214 = sadd.s32 %s26, %s27
        %s215 = sadd.s32 %s26, %s27
        %p216 = scmp.eq.s32.totalorder %s27, 0
        // Predicated region
        $region37: #{tpu_custom_call.1} parent=27 // pred_check
          %p217 = pneg %p216
        $region38: #{tpu_custom_call.1} parent=27 // pred_check_branch
          %219 = sbr.rel (%p217) target = $region40
        $region39: #{tpu_custom_call.1} parent=27 // pred_region
          %220 = vst [vmem:[%s213] sm:$0xff] 0.0
        $region40: #{tpu_custom_call.1} parent=27 // pred_fallthru
          _
        %v221 = vld [vmem:[%s179] sm:$0xff]
        %v222 = vld [vmem:[%s188] sm:$0xff]
        %223 = vmax.xlane.f32.xlu0 %v221
        %v224 = vpop.xlane.xlu0 %223
        %225 = vmax.xlane.f32.xlu0 %v222
        %v226 = vpop.xlane.xlu0 %225
        %v227 = vsub.f32 %v221, %v224
        %v228 = vmul.f32 %v227, 1.442695
        %v229 = vpow.pop %v228
        %v230 = vsub.f32 %v222, %v226
        %v231 = vmul.f32 %v230, 1.442695
        %v232 = vpow.pop %v231
        %233 = vadd.xlane.f32.xlu0 %v229
        %v234 = vpop.xlane.xlu0 %233
        %235 = vadd.xlane.f32.xlu0 %v232
        %v236 = vpop.xlane.xlu0 %235
        %v237 = vlog2.pop %v234
        %v238 = vmul.f32 %v237, 0.6931472
        %v239 = vsub.f32 %v227, %v238
        %v240 = vlog2.pop %v236
        %v241 = vmul.f32 %v240, 0.6931472
        %v242 = vsub.f32 %v230, %v241
        %v243 = vrcp.pop %v234
        %v244 = vmul.f32 %v229, %v243
        %v245 = vrcp.pop %v236
        %v246 = vmul.f32 %v232, %v245
        %v247 = vsub.f32 %v246, %v244
        %v248 = vsub.f32 %v242, %v239
        %v249 = vmul.f32 %v247, %v248
        %v250 = vld [vmem:[%s213] sm:$0xff]
        %v251 = vadd.f32 %v249, 0.0
        %v252 = vadd.f32 %v250, %v251
        %253 = vst [vmem:[%s213] sm:$0xff] %v252
        %s254 = sand.u32 %s98, 1
        %s255 = scalar_lea.sflag [#allocation4], %s254
        %s256 = sand.u32 %s98, 1
        %s257 = smul.addr %s256, 8
        %s258 = scalar_lea.vmem [#allocation7], %s257
        // Predicated region
        $region41: #{tpu_custom_call.1} parent=27 // pred_check
          %p259 = pneg %p108
        $region42: #{tpu_custom_call.1} parent=27 // pred_check_branch
          %261 = sbr.rel (%p259) target = $region44
        $region43: #{tpu_custom_call.1} parent=27 // pred_region
          %s263 = ssub.s32 128, 128
          %264 = vsyncadd %s255, %s263
          %s265 = smul.addr %s26, 128
          %s266 = scalar_lea.hbm %s2, %s265
          %s268 = sshll.u32 %s258, 4
          %s269 = int_to_ptr.vmem [resolvable:$true] %s268
          %271 = dma.vmem_to_hbm [thread:$0]  %s269, 128, %s266, %s255
        $region44: #{tpu_custom_call.1} parent=27 // pred_fallthru
          _
      $region28: #{tpu_custom_call.1} parent=5 // pred_fallthru
        _
      %p272 = scmp.le.s32.totalorder 2, %s17
      // Predicated region
      $region45: #{tpu_custom_call.1} parent=5 // pred_check
        %p273 = pneg %p272
      $region46: #{tpu_custom_call.1} parent=5 // pred_check_branch
        %275 = sbr.rel (%p273) target = $region48
      $region47: #{tpu_custom_call.1} parent=5 // pred_region
        %s276 = ssub.s32 %s17, 2
        // Predicated region
        $region49: #{tpu_custom_call.1} parent=47 // pred_check
          %p277 = pneg %p114
        $region50: #{tpu_custom_call.1} parent=47 // pred_check_branch
          %279 = sbr.rel (%p277) target = $region52
        $region51: #{tpu_custom_call.1} parent=47 // pred_region
          %s280 = sand.u32 %s99, 1
          %s281 = scalar_lea.sflag [#allocation4], %s280
          %s282 = sand.u32 %s99, 1
          %s283 = smul.addr %s282, 8
          %s284 = scalar_lea.vmem [#allocation7], %s283
          %285 = dma.done %s281, 128
        $region52: #{tpu_custom_call.1} parent=47 // pred_fallthru
          _
      $region48: #{tpu_custom_call.1} parent=5 // pred_fallthru
        _
    $region6: #{tpu_custom_call.1} parent=1 // loop_footer
      %s21 = sadd.s32 1, %s17
    $region7: #{tpu_custom_call.1} parent=1 // loop_footer_branch
      %16 = sbr.rel target = $region3
    $region8: #{tpu_custom_call.1} parent=1 // loop_exit
      _
    %286 = vsyncpa [#allocation3], 1
    %s287 = scalar_lea.sflag [#allocation3], 1
    %288 = vsyncpa %s287, 1
    %289 = vsyncpa [#allocation6], 1
    %s290 = scalar_lea.sflag [#allocation6], 1
    %291 = vsyncpa %s290, 1
    %292 = vsyncpa [#allocation4], 1
    %s293 = scalar_lea.sflag [#allocation4], 1
    %294 = vsyncpa %s293, 1

</llo_original>
